<compile_context>
chip_gen: v7x
topology: tpu7x:2x2x1
jax: 0.10.0
libtpu: 0.0.40
codegen_flags: <defaults>
</compile_context>

<pallas_src>
import functools

import jax
import jax.numpy as jnp
from jax.experimental import pallas as pl
from jax.experimental.pallas import tpu as pltpu

_LANE = 1024          # lane-dense last dim (multiple of 128)
_MAX_TILE_ROWS = 512  # 512 * 1024 * 4 B = 2 MiB per f32 tile


def _round_up(x, m):
    return (x + m - 1) // m * m


def _gaussian_noise_kernel_tpu(seed_ref, x_ref, o_ref, *, mean, std):
    # Per-tile seed: mix the grid step into the seed so tiles draw independent noise.
    pltpu.prng_seed(seed_ref[0], pl.program_id(0))
    noise = pltpu.stateful_normal(x_ref.shape, jnp.float32)
    o_ref[...] = (x_ref[...].astype(jnp.float32)
                  + noise * jnp.float32(std)
                  + jnp.float32(mean)).astype(o_ref.dtype)


def _add_noise_kernel(x_ref, n_ref, o_ref, *, mean, std):
    # Portable fallback (noise supplied from HBM) for non-TPU / interpret execution.
    o_ref[...] = (x_ref[...].astype(jnp.float32)
                  + n_ref[...].astype(jnp.float32) * jnp.float32(std)
                  + jnp.float32(mean)).astype(o_ref.dtype)


def gaussian_noise(x, seed, mean=0.0, std=1.0):
    """Pallas equivalent of GaussianNoise.forward: x + randn_like(x) * std + mean."""
    orig_shape = x.shape
    total = x.size

    lane = _LANE if total >= _LANE else 128
    rows = pl.cdiv(total, lane)
    tile_rows = min(_MAX_TILE_ROWS, _round_up(rows, 8))
    rows_padded = _round_up(rows, tile_rows)
    padded_total = rows_padded * lane

    x_flat = x.reshape(-1)
    if padded_total != total:
        x_flat = jnp.pad(x_flat, (0, padded_total - total))
    x2 = x_flat.reshape(rows_padded, lane)

    grid = (rows_padded // tile_rows,)
    tile_spec = pl.BlockSpec((tile_rows, lane), lambda i: (i, 0))

    if jax.default_backend() == "tpu":
        seed_arr = jnp.asarray([seed], dtype=jnp.int32)
        out2 = pl.pallas_call(
            functools.partial(_gaussian_noise_kernel_tpu, mean=mean, std=std),
            out_shape=jax.ShapeDtypeStruct(x2.shape, x2.dtype),
            grid=grid,
            in_specs=[
                pl.BlockSpec(memory_space=pltpu.MemorySpace.SMEM),  # seed scalar
                tile_spec,                                          # input tile
            ],
            out_specs=tile_spec,
            input_output_aliases={1: 0},  # elementwise, same shape/dtype -> in-place
            compiler_params=pltpu.CompilerParams(
                dimension_semantics=("parallel",),
                vmem_limit_bytes=32 * 1024 * 1024,
            ),
            cost_estimate=pl.CostEstimate(
                flops=3 * padded_total,
                transcendentals=2 * padded_total,
                bytes_accessed=2 * padded_total * x2.dtype.itemsize,
            ),
        )(seed_arr, x2)
    else:
        # TODO(synk): TPU hardware PRNG (prng_seed/stateful_normal) has no non-TPU
        # lowering; off-TPU we draw the noise with jax.random and fuse the add.
        noise2 = jax.random.normal(jax.random.PRNGKey(seed), x2.shape, jnp.float32)
        out2 = pl.pallas_call(
            functools.partial(_add_noise_kernel, mean=mean, std=std),
            out_shape=jax.ShapeDtypeStruct(x2.shape, x2.dtype),
            grid=grid,
            in_specs=[tile_spec, tile_spec],
            out_specs=tile_spec,
        )(x2, noise2)

    return out2.reshape(-1)[:total].reshape(orig_shape)


if __name__ == "__main__":
    key = jax.random.PRNGKey(0)
    x = jax.random.normal(key, (2, 4, 16, 16), dtype=jnp.float32)

    y = gaussian_noise(x, seed=1234, mean=0.0, std=1.0)
    jax.block_until_ready(y)

    # Sanity: shape/dtype preserved, noise present, roughly zero-mean / unit-std.
    assert y.shape == x.shape and y.dtype == x.dtype
    noise = y - x
    assert float(jnp.abs(noise).max()) > 0.0
    assert abs(float(noise.mean())) < 0.2
    assert 0.7 < float(noise.std()) < 1.3

    print("KERNEL_OK")
</pallas_src>

<mosaic_0001>
module attributes {stable_mosaic.version = 11 : i64} {
  func.func @_add_noise_kernel(%arg0: i32, %arg1: memref<8x1024xf32, #tpu.memory_space<vmem>>, %arg2: memref<8x1024xf32, #tpu.memory_space<vmem>>, %arg3: memref<8x1024xf32, #tpu.memory_space<vmem>>) attributes {dimension_semantics = [#tpu.dimension_semantics<arbitrary>], iteration_bounds = array<i64: 1>, scalar_prefetch = 0 : i64, scratch_operands = 0 : i64, tpu.core_type = #tpu.core_type<tc>, window_params = [{transform_indices = @transform_0, window_bounds = array<i64: 8, 1024>}, {transform_indices = @transform_1, window_bounds = array<i64: 8, 1024>}, {transform_indices = @transform_2, window_bounds = array<i64: 8, 1024>}]} {
    %c0 = arith.constant 0 : index
    %c0_0 = arith.constant 0 : index
    %0 = vector.load %arg1[%c0, %c0_0] : memref<8x1024xf32, #tpu.memory_space<vmem>>, vector<8x1024xf32>
    %c0_1 = arith.constant 0 : index
    %c0_2 = arith.constant 0 : index
    %1 = vector.load %arg2[%c0_1, %c0_2] : memref<8x1024xf32, #tpu.memory_space<vmem>>, vector<8x1024xf32>
    %cst = arith.constant 1.000000e+00 : f32
    %2 = vector.broadcast %cst : f32 to vector<8x1024xf32>
    %3 = arith.mulf %1, %2 : vector<8x1024xf32>
    %4 = arith.addf %0, %3 : vector<8x1024xf32>
    %cst_3 = arith.constant 0.000000e+00 : f32
    %5 = vector.broadcast %cst_3 : f32 to vector<8x1024xf32>
    %6 = arith.addf %4, %5 : vector<8x1024xf32>
    %c0_4 = arith.constant 0 : index
    %c0_5 = arith.constant 0 : index
    %7 = vector.load %arg3[%c0_4, %c0_5] : memref<8x1024xf32, #tpu.memory_space<vmem>>, vector<8x1024xf32>
    tpu.vector_store %arg3[%c0_4, %c0_5], %6 {strides = array<i32>} : memref<8x1024xf32, #tpu.memory_space<vmem>>, vector<8x1024xf32>,
    return
  }
  func.func @transform_0(%arg0: i32) -> (i32, i32) {
    %c0_i32 = arith.constant 0 : i32
    %c0_i32_0 = arith.constant 0 : i32
    return %arg0, %c0_i32 : i32, i32
  }
  func.func @transform_1(%arg0: i32) -> (i32, i32) {
    %c0_i32 = arith.constant 0 : i32
    %c0_i32_0 = arith.constant 0 : i32
    return %arg0, %c0_i32 : i32, i32
  }
  func.func @transform_2(%arg0: i32) -> (i32, i32) {
    %c0_i32 = arith.constant 0 : i32
    %c0_i32_0 = arith.constant 0 : i32
    return %arg0, %c0_i32 : i32, i32
  }
}

</mosaic_0001>

<llo_original>
// kernel: tpu_custom_call.1
$region0: #{tpu_custom_call.1}
  #allocation0 [shape = 'u32[]', space=smem, size = 0x4, offset = 0x4, fixed_abs, tag = 'smem constant byte address 0x4 - core index']
  #allocation1 [shape = 'u32[144,128]{1,0:T(1,128)}', space=vmem, size = 0x12000, scoped, tag = 'internal scratch']
  %s0 = inlined_call_operand.hbm [shape: f32[8,1024], index: 0, kind: input, shape index: {}]
  %s1 = inlined_call_operand.hbm [shape: f32[8,1024], index: 1, kind: input, shape index: {}]
  %s2 = inlined_call_operand.hbm [shape: f32[8,1024], index: 2, kind: output, shape index: {}]
  %s3 = sld [smem:[#allocation0]]
  $region26: #{tpu_custom_call.1} parent=0
    _
  %s5 = ssub.s32 1, %s3
  %s6 = scalar_select 0, %s5, %s3
  $region1: #{tpu_custom_call.1} parent=0
    #allocation2 [shape = 'u8[32768]{0}', space=vmem, size = 0x8000, scoped, tag = 'input window, operand 0, single buffered']
    #allocation3 [shape = 's32[1]{0}', space=sflag, size = 0x4, scoped, tag = 'scoped memory for tpu_custom_call.1']
    #allocation4 [shape = 's32[1]{0}', space=sflag, size = 0x4, scoped, tag = 'scoped memory for tpu_custom_call.1']
    #allocation5 [shape = 'u8[32768]{0}', space=vmem, size = 0x8000, scoped, tag = 'input window, operand 1, single buffered']
    #allocation6 [shape = 's32[1]{0}', space=sflag, size = 0x4, scoped, tag = 'scoped memory for tpu_custom_call.1']
    #allocation7 [shape = 'u8[32768]{0}', space=vmem, size = 0x8000, scoped, tag = 'output window, operand 0, single buffered']
    %7 = vsyncpa [#allocation3], 0
    %8 = vsyncpa [#allocation6], 0
    %9 = vsyncpa [#allocation4], 0
    // Predicated region
    $region2: #{tpu_custom_call.1} parent=1 // pred_check
      _
    $region3: #{tpu_custom_call.1} parent=1 // pred_check_branch
      %11 = sbr.rel (0) target = $region5
    $region4: #{tpu_custom_call.1} parent=1 // pred_region
      %s13 = ssub.s32 1024, 1024
      %14 = vsyncadd [#allocation3], %s13
      %s16 = sshll.u32 [#allocation2], 4
      %s17 = int_to_ptr.vmem [resolvable:$true] %s16
      %19 = dma.hbm_to_vmem [thread:$0]  %s0, 1024, %s17, [#allocation3]
    $region5: #{tpu_custom_call.1} parent=1 // pred_fallthru
      _
    // Predicated region
    $region6: #{tpu_custom_call.1} parent=1 // pred_check
      _
    $region7: #{tpu_custom_call.1} parent=1 // pred_check_branch
      %21 = sbr.rel (0) target = $region9
    $region8: #{tpu_custom_call.1} parent=1 // pred_region
      %s23 = ssub.s32 1024, 1024
      %24 = vsyncadd [#allocation6], %s23
      %s26 = sshll.u32 [#allocation5], 4
      %s27 = int_to_ptr.vmem [resolvable:$true] %s26
      %29 = dma.hbm_to_vmem [thread:$0]  %s1, 1024, %s27, [#allocation6]
    $region9: #{tpu_custom_call.1} parent=1 // pred_fallthru
      _
    // Predicated region
    $region10: #{tpu_custom_call.1} parent=1 // pred_check
      _
    $region11: #{tpu_custom_call.1} parent=1 // pred_check_branch
      %31 = sbr.rel (0) target = $region13
    $region12: #{tpu_custom_call.1} parent=1 // pred_region
      %32 = dma.done [#allocation3], 1024
    $region13: #{tpu_custom_call.1} parent=1 // pred_fallthru
      _
    // Predicated region
    $region14: #{tpu_custom_call.1} parent=1 // pred_check
      _
    $region15: #{tpu_custom_call.1} parent=1 // pred_check_branch
      %34 = sbr.rel (0) target = $region17
    $region16: #{tpu_custom_call.1} parent=1 // pred_region
      %35 = dma.done [#allocation6], 1024
    $region17: #{tpu_custom_call.1} parent=1 // pred_fallthru
      _
    %v36 = vld [vmem:[#allocation2] sm:$0xff]
    %v37 = vld [vmem:[#allocation2 + $0x8] sm:$0xff]
    %v38 = vld [vmem:[#allocation2 + $0x10] sm:$0xff]
    %v39 = vld [vmem:[#allocation2 + $0x18] sm:$0xff]
    %v40 = vld [vmem:[#allocation2 + $0x20] sm:$0xff]
    %v41 = vld [vmem:[#allocation2 + $0x28] sm:$0xff]
    %v42 = vld [vmem:[#allocation2 + $0x30] sm:$0xff]
    %v43 = vld [vmem:[#allocation2 + $0x38] sm:$0xff]
    %v44 = vld [vmem:[#allocation5] sm:$0xff]
    %v45 = vld [vmem:[#allocation5 + $0x8] sm:$0xff]
    %v46 = vld [vmem:[#allocation5 + $0x10] sm:$0xff]
    %v47 = vld [vmem:[#allocation5 + $0x18] sm:$0xff]
    %v48 = vld [vmem:[#allocation5 + $0x20] sm:$0xff]
    %v49 = vld [vmem:[#allocation5 + $0x28] sm:$0xff]
    %v50 = vld [vmem:[#allocation5 + $0x30] sm:$0xff]
    %v51 = vld [vmem:[#allocation5 + $0x38] sm:$0xff]
    %v52 = vadd.f32 %v36, %v44
    %v53 = vadd.f32 %v37, %v45
    %v54 = vadd.f32 %v38, %v46
    %v55 = vadd.f32 %v39, %v47
    %v56 = vadd.f32 %v40, %v48
    %v57 = vadd.f32 %v41, %v49
    %v58 = vadd.f32 %v42, %v50
    %v59 = vadd.f32 %v43, %v51
    %v60 = vadd.f32 %v52, 0.0
    %v61 = vadd.f32 %v53, 0.0
    %v62 = vadd.f32 %v54, 0.0
    %v63 = vadd.f32 %v55, 0.0
    %v64 = vadd.f32 %v56, 0.0
    %v65 = vadd.f32 %v57, 0.0
    %v66 = vadd.f32 %v58, 0.0
    %v67 = vadd.f32 %v59, 0.0
    %68 = vst [vmem:[#allocation7] sm:$0xff] %v60
    %69 = vst [vmem:[#allocation7 + $0x8] sm:$0xff] %v61
    %70 = vst [vmem:[#allocation7 + $0x10] sm:$0xff] %v62
    %71 = vst [vmem:[#allocation7 + $0x18] sm:$0xff] %v63
    %72 = vst [vmem:[#allocation7 + $0x20] sm:$0xff] %v64
    %73 = vst [vmem:[#allocation7 + $0x28] sm:$0xff] %v65
    %74 = vst [vmem:[#allocation7 + $0x30] sm:$0xff] %v66
    %75 = vst [vmem:[#allocation7 + $0x38] sm:$0xff] %v67
    // Predicated region
    $region18: #{tpu_custom_call.1} parent=1 // pred_check
      _
    $region19: #{tpu_custom_call.1} parent=1 // pred_check_branch
      %77 = sbr.rel (0) target = $region21
    $region20: #{tpu_custom_call.1} parent=1 // pred_region
      %s79 = ssub.s32 1024, 1024
      %80 = vsyncadd [#allocation4], %s79
      %s82 = sshll.u32 [#allocation7], 4
      %s83 = int_to_ptr.vmem [resolvable:$true] %s82
      %85 = dma.vmem_to_hbm [thread:$0]  %s83, 1024, %s2, [#allocation4]
    $region21: #{tpu_custom_call.1} parent=1 // pred_fallthru
      _
    // Predicated region
    $region22: #{tpu_custom_call.1} parent=1 // pred_check
      _
    $region23: #{tpu_custom_call.1} parent=1 // pred_check_branch
      %87 = sbr.rel (0) target = $region25
    $region24: #{tpu_custom_call.1} parent=1 // pred_region
      %88 = dma.done [#allocation4], 1024
    $region25: #{tpu_custom_call.1} parent=1 // pred_fallthru
      _
    %89 = vsyncpa [#allocation3], 1
    %90 = vsyncpa [#allocation6], 1
    %91 = vsyncpa [#allocation4], 1

</llo_original>
